<compile_context>
chip_gen: v5e
topology: v5e:2x2
jax: 0.10.0
libtpu: 0.0.40
codegen_flags: <defaults>
</compile_context>

<pallas_src>
import functools

import jax
import jax.numpy as jnp
from jax.experimental import pallas as pl
from jax.experimental.pallas import tpu as pltpu

S_PAD = 128   # lane-dense decoder output width
SUBLANE = 8   # batch padded to one full sublane


def _round_up(x, m):
    return -(-x // m) * m


# --------------------------------------------------------------------------
# Kernel 1: fused multi-step controller loop (one launch for the whole sample)
# --------------------------------------------------------------------------
def _fused_kernel(pre_ref,     # VMEM [S, Bp, 4H]  x@W_ih^T + (b_ih+b_hh) per step
                  whh_ref,     # VMEM [H, 4H]      W_hh^T
                  wdec_ref,    # VMEM [S, H, S_PAD]  decoders (already / temp)
                  bdec_ref,    # VMEM [S, Bp, S_PAD] decoder bias (already / temp)
                  h0_ref,      # VMEM [Bp, H]
                  c0_ref,      # VMEM [Bp, H]
                  logits_ref,  # VMEM [S, Bp, S_PAD]
                  h_out_ref,   # VMEM [Bp, H]
                  c_out_ref,   # VMEM [Bp, H]
                  h_all_ref,   # VMEM scratch [S, Bp, H]
                  *, hid, num_steps, tanh_c, is_train):
    h = h0_ref[...]
    c = c0_ref[...]
    whh = whh_ref[...]          # loaded once, resident for every step

    # Serial recurrence: only the H=hid matmul + nonlinearities are on the
    # critical path.  Static loop -> fully unrolled.
    for step in range(num_steps):
        gates = pre_ref[step] + jnp.dot(h, whh,
                                        preferred_element_type=jnp.float32)
        i_g = jax.nn.sigmoid(gates[:, 0 * hid:1 * hid])
        f_g = jax.nn.sigmoid(gates[:, 1 * hid:2 * hid])
        g_g = jnp.tanh(gates[:, 2 * hid:3 * hid])
        o_g = jax.nn.sigmoid(gates[:, 3 * hid:4 * hid])
        c = f_g * c + i_g * g_g
        h = o_g * jnp.tanh(c)
        h_all_ref[step] = h

    h_out_ref[...] = h
    c_out_ref[...] = c

    # Deferred decoders: one batched matmul over all steps (off the serial
    # chain) + a single lane-dense unmasked store.
    logits = jnp.einsum('sbh,shn->sbn', h_all_ref[...], wdec_ref[...],
                        preferred_element_type=jnp.float32) + bdec_ref[...]
    if is_train:
        logits = tanh_c * jnp.tanh(logits)
    logits_ref[...] = logits


@functools.partial(jax.jit, static_argnames=("tanh_c", "is_train"))
def controller_fused(tokens, enc, w_ih_t, w_hh_t, b_gates,
                     dec_w_stack, dec_b_stack, h0, c0, *, tanh_c, is_train):
    num_steps, B = tokens.shape
    T, H = enc.shape
    s_pad = dec_w_stack.shape[-1]
    Bp = _round_up(B, SUBLANE)

    # Input projection precomputed outside the kernel.
    # Step 0 consumes the zero `static_inputs`; steps >= 1 the token embedding.
    # NOTE: JAX clamps out-of-range token ids (PyTorch nn.Embedding would raise).
    emb = enc[tokens]                                        # [S, B, H]
    emb = emb.at[0].set(0.0)
    pre = jnp.einsum('sbh,hg->sbg', emb, w_ih_t) + b_gates   # [S, B, 4H]

    pre = jnp.pad(pre, ((0, 0), (0, Bp - B), (0, 0)))
    h0p = jnp.pad(h0, ((0, Bp - B), (0, 0)))
    c0p = jnp.pad(c0, ((0, Bp - B), (0, 0)))
    bdec = jnp.broadcast_to(dec_b_stack, (num_steps, Bp, s_pad))

    kernel = functools.partial(_fused_kernel, hid=H, num_steps=num_steps,
                               tanh_c=tanh_c, is_train=is_train)
    vmem = pl.BlockSpec(memory_space=pltpu.MemorySpace.VMEM)
    logits, h_new, c_new = pl.pallas_call(
        kernel,
        out_shape=(
            jax.ShapeDtypeStruct((num_steps, Bp, s_pad), jnp.float32),
            jax.ShapeDtypeStruct((Bp, H), jnp.float32),
            jax.ShapeDtypeStruct((Bp, H), jnp.float32),
        ),
        in_specs=[vmem] * 6,
        out_specs=(vmem, vmem, vmem),
        scratch_shapes=[pltpu.VMEM((num_steps, Bp, H), jnp.float32)],
    )(pre, w_hh_t, dec_w_stack, bdec, h0p, c0p)
    return logits[:, :B, :], h_new[:B], c_new[:B]


# --------------------------------------------------------------------------
# Kernel 2: single Controller.forward step (API parity; hx/cx aliased in place)
# --------------------------------------------------------------------------
def _step_kernel(embed_ref, h_ref, c_ref, wih_ref, whh_ref, bg_ref,
                 wdec_ref, bdec_ref, logits_ref, h_out_ref, c_out_ref,
                 *, hid, tanh_c, is_train):
    gates = (jnp.dot(embed_ref[...], wih_ref[...],
                     preferred_element_type=jnp.float32)
             + jnp.dot(h_ref[...], whh_ref[...],
                       preferred_element_type=jnp.float32)
             + bg_ref[...])
    i_g = jax.nn.sigmoid(gates[:, 0 * hid:1 * hid])
    f_g = jax.nn.sigmoid(gates[:, 1 * hid:2 * hid])
    g_g = jnp.tanh(gates[:, 2 * hid:3 * hid])
    o_g = jax.nn.sigmoid(gates[:, 3 * hid:4 * hid])
    c_new = f_g * c_ref[...] + i_g * g_g
    h_new = o_g * jnp.tanh(c_new)
    logits = jnp.dot(h_new, wdec_ref[...],
                     preferred_element_type=jnp.float32) + bdec_ref[...]
    if is_train:
        logits = tanh_c * jnp.tanh(logits)
    logits_ref[...] = logits
    h_out_ref[...] = h_new
    c_out_ref[...] = c_new


@functools.partial(jax.jit, static_argnames=("tanh_c", "is_train"))
def controller_step(embed, hx, cx, w_ih_t, w_hh_t, b_gates, w_dec, b_dec,
                    *, tanh_c, is_train):
    B, H = embed.shape
    s_pad = w_dec.shape[-1]
    Bp = _round_up(B, SUBLANE)
    ep = jnp.pad(embed, ((0, Bp - B), (0, 0)))
    hp = jnp.pad(hx, ((0, Bp - B), (0, 0)))
    cp = jnp.pad(cx, ((0, Bp - B), (0, 0)))
    kernel = functools.partial(_step_kernel, hid=H, tanh_c=tanh_c,
                               is_train=is_train)
    vmem = pl.BlockSpec(memory_space=pltpu.MemorySpace.VMEM)
    logits, h_new, c_new = pl.pallas_call(
        kernel,
        out_shape=(
            jax.ShapeDtypeStruct((Bp, s_pad), jnp.float32),
            jax.ShapeDtypeStruct((Bp, H), jnp.float32),
            jax.ShapeDtypeStruct((Bp, H), jnp.float32),
        ),
        in_specs=[vmem] * 8,
        out_specs=(vmem, vmem, vmem),
        input_output_aliases={1: 1, 2: 2},   # hx -> h_new, cx -> c_new
    )(ep, hp, cp, w_ih_t, w_hh_t, b_gates, w_dec, b_dec)
    return logits[:B], h_new[:B], c_new[:B]


# --------------------------------------------------------------------------
# Controller wrapper (parameter setup = JAX glue)
# --------------------------------------------------------------------------
class ControllerPallas:
    def __init__(self, *, num_blocks=4, controller_hid=32,
                 shared_rnn_activations=("tanh", "ReLU", "identity", "sigmoid"),
                 softmax_temperature=5.0, tanh_c=2.5, mode="train", seed=0):
        self.num_blocks = num_blocks
        self.hid = controller_hid
        self.softmax_temperature = float(softmax_temperature)
        self.tanh_c = float(tanh_c)
        self.mode = mode

        # num_tokens as in the 'rnn' branch of Controller.__init__
        self.num_tokens = [len(shared_rnn_activations)]
        for idx in range(num_blocks):
            self.num_tokens += [idx + 1, len(shared_rnn_activations)]
        num_total_tokens = sum(self.num_tokens)

        key = jax.random.PRNGKey(seed)
        ks = jax.random.split(key, 5 + len(self.num_tokens))
        init_range = 0.1

        def u(k, shape):
            return jax.random.uniform(k, shape, jnp.float32,
                                      -init_range, init_range)

        H = self.hid
        # Embedding table
        self.encoder_w = u(ks[0], (num_total_tokens, H))
        # LSTMCell params (PyTorch layout [4H, H] / [4H]), gate order (i,f,g,o)
        w_ih = u(ks[1], (4 * H, H))
        w_hh = u(ks[2], (4 * H, H))
        b_ih = u(ks[3], (4 * H,))
        b_hh = u(ks[4], (4 * H,))
        self.w_ih_t = w_ih.T                      # [H, 4H]
        self.w_hh_t = w_hh.T                      # [H, 4H]
        self.b_gates = (b_ih + b_hh).reshape(1, 4 * H)
        # raw copies kept only for the pure-JAX reference check
        self._w_ih_t, self._w_hh_t = w_ih.T, w_hh.T
        self._b_ih, self._b_hh = b_ih, b_hh
        # Decoders: weight U(-0.1,0.1), bias 0 (reset_parameters).
        # Fold 1/softmax_temperature and pad output dim to 128 lanes.
        self._dec_w_t_raw, self._dec_b_raw = [], []
        dw, db = [], []
        for i, size in enumerate(self.num_tokens):
            w = u(ks[5 + i], (size, H))
            b = jnp.zeros((size,), jnp.float32)
            self._dec_w_t_raw.append(w.T)
            self._dec_b_raw.append(b)
            w_t = w.T / self.softmax_temperature                  # [H, size]
            b_s = b / self.softmax_temperature
            dw.append(jnp.pad(w_t, ((0, 0), (0, S_PAD - size))))
            db.append(jnp.pad(b_s, (0, S_PAD - size)).reshape(1, S_PAD))
        self.dec_w_stack = jnp.stack(dw)    # [n_dec, H, 128]
        self.dec_b_stack = jnp.stack(db)    # [n_dec, 1, 128]

    def init_hidden(self, batch_size):
        z = jnp.zeros((batch_size, self.hid), jnp.float32)
        return (z, z)

    # ---- per-step API (matches Controller.forward) ----
    def forward(self, inputs, hidden, block_idx, is_embed):
        embed = inputs if is_embed else self.encoder_w[inputs]
        hx, cx = hidden
        logits_pad, h_new, c_new = controller_step(
            embed.astype(jnp.float32), hx, cx,
            self.w_ih_t, self.w_hh_t, self.b_gates,
            self.dec_w_stack[block_idx], self.dec_b_stack[block_idx],
            tanh_c=self.tanh_c, is_train=(self.mode == "train"))
        logits = logits_pad[:, : self.num_tokens[block_idx]]
        return logits, (h_new, c_new)

    # ---- fused API: whole sampling loop in ONE pallas_call ----
    def forward_fused(self, tokens, hidden):
        """tokens[s, b] = encoder token consumed at step s (tokens[0] ignored:
        step 0 uses the zero `static_inputs`, i.e. is_embed=True).  Decoder
        index == step index, matching ENAS Controller.sample()."""
        num_steps = tokens.shape[0]
        hx, cx = hidden
        logits_pad, h_new, c_new = controller_fused(
            tokens.astype(jnp.int32), self.encoder_w,
            self.w_ih_t, self.w_hh_t, self.b_gates,
            self.dec_w_stack[:num_steps], self.dec_b_stack[:num_steps],
            hx, cx, tanh_c=self.tanh_c, is_train=(self.mode == "train"))
        logits = [logits_pad[s, :, : self.num_tokens[s]]
                  for s in range(num_steps)]
        return logits, (h_new, c_new)


# --------------------------------------------------------------------------
# Pure-JAX reference for correctness checks
# --------------------------------------------------------------------------
def _reference_step(ctrl, embed, hx, cx, block_idx):
    H = ctrl.hid
    gates = embed @ ctrl._w_ih_t + ctrl._b_ih + hx @ ctrl._w_hh_t + ctrl._b_hh
    i = jax.nn.sigmoid(gates[:, :H])
    f = jax.nn.sigmoid(gates[:, H:2 * H])
    g = jnp.tanh(gates[:, 2 * H:3 * H])
    o = jax.nn.sigmoid(gates[:, 3 * H:])
    c_new = f * cx + i * g
    h_new = o * jnp.tanh(c_new)
    logits = h_new @ ctrl._dec_w_t_raw[block_idx] + ctrl._dec_b_raw[block_idx]
    logits = logits / ctrl.softmax_temperature
    if ctrl.mode == "train":
        logits = ctrl.tanh_c * jnp.tanh(logits)
    return logits, h_new, c_new


if __name__ == "__main__":
    import numpy as np

    batch = 2
    num_blocks = 4
    ctrl = ControllerPallas(num_blocks=num_blocks, controller_hid=32,
                            mode="train", seed=0)
    key = jax.random.PRNGKey(0)
    num_steps = 2 * (num_blocks - 1) + 1        # same loop length as sample()
    T = sum(ctrl.num_tokens)

    # ---------- fused multi-step path (one launch for the whole loop) -------
    tokens = jax.random.randint(key, (num_steps, batch), 0, T, dtype=jnp.int32)
    hidden0 = ctrl.init_hidden(batch)
    logits_list, (hf, cf) = ctrl.forward_fused(tokens, hidden0)
    jax.block_until_ready((logits_list, hf, cf))

    h_r = jnp.zeros((batch, ctrl.hid), jnp.float32)
    c_r = jnp.zeros((batch, ctrl.hid), jnp.float32)
    for s in range(num_steps):
        embed = (jnp.zeros((batch, ctrl.hid), jnp.float32) if s == 0
                 else ctrl.encoder_w[tokens[s]])
        lg_r, h_r, c_r = _reference_step(ctrl, embed, h_r, c_r, s)
        np.testing.assert_allclose(np.asarray(logits_list[s]), np.asarray(lg_r),
                                   rtol=2e-4, atol=2e-4)
    np.testing.assert_allclose(np.asarray(hf), np.asarray(h_r), rtol=2e-4, atol=2e-4)
    np.testing.assert_allclose(np.asarray(cf), np.asarray(c_r), rtol=2e-4, atol=2e-4)

    # ---------- per-step path (Controller.forward API) -----------------------
    hidden = ctrl.init_hidden(batch)
    inputs0 = jnp.zeros((batch, ctrl.hid), jnp.float32)
    logits0, hidden = ctrl.forward(inputs0, hidden, block_idx=0, is_embed=True)
    tok = jax.random.randint(jax.random.fold_in(key, 1), (batch,), 0, T)
    logits1, hidden = ctrl.forward(tok, hidden, block_idx=1, is_embed=False)
    jax.block_until_ready((logits0, logits1, hidden))

    r0, rh0, rc0 = _reference_step(ctrl, inputs0,
                                   jnp.zeros((batch, ctrl.hid)),
                                   jnp.zeros((batch, ctrl.hid)), 0)
    r1, rh1, rc1 = _reference_step(ctrl, ctrl.encoder_w[tok], rh0, rc0, 1)
    np.testing.assert_allclose(np.asarray(logits0), np.asarray(r0), rtol=2e-4, atol=2e-4)
    np.testing.assert_allclose(np.asarray(logits1), np.asarray(r1), rtol=2e-4, atol=2e-4)
    np.testing.assert_allclose(np.asarray(hidden[0]), np.asarray(rh1), rtol=2e-4, atol=2e-4)
    np.testing.assert_allclose(np.asarray(hidden[1]), np.asarray(rc1), rtol=2e-4, atol=2e-4)

    print("KERNEL_OK")
</pallas_src>

<mosaic_0001>
module attributes {stable_mosaic.version = 11 : i64} {
  func.func @_fused_kernel(%arg0: memref<7x8x128xf32, #tpu.memory_space<vmem>>, %arg1: memref<32x128xf32, #tpu.memory_space<vmem>>, %arg2: memref<7x32x128xf32, #tpu.memory_space<vmem>>, %arg3: memref<7x8x128xf32, #tpu.memory_space<vmem>>, %arg4: memref<8x32xf32, #tpu.memory_space<vmem>>, %arg5: memref<8x32xf32, #tpu.memory_space<vmem>>, %arg6: memref<7x8x128xf32, #tpu.memory_space<vmem>>, %arg7: memref<8x32xf32, #tpu.memory_space<vmem>>, %arg8: memref<8x32xf32, #tpu.memory_space<vmem>>, %arg9: memref<7x8x32xf32, #tpu.memory_space<vmem>>) attributes {dimension_semantics = [], scalar_prefetch = 0 : i64, scratch_operands = 1 : i64, tpu.core_type = #tpu.core_type<tc>} {
    %c0 = arith.constant 0 : index
    %c0_0 = arith.constant 0 : index
    %0 = vector.load %arg4[%c0, %c0_0] : memref<8x32xf32, #tpu.memory_space<vmem>>, vector<8x32xf32>
    %c0_1 = arith.constant 0 : index
    %c0_2 = arith.constant 0 : index
    %1 = vector.load %arg5[%c0_1, %c0_2] : memref<8x32xf32, #tpu.memory_space<vmem>>, vector<8x32xf32>
    %c0_3 = arith.constant 0 : index
    %c0_4 = arith.constant 0 : index
    %2 = vector.load %arg1[%c0_3, %c0_4] : memref<32x128xf32, #tpu.memory_space<vmem>>, vector<32x128xf32>
    %c0_5 = arith.constant 0 : index
    %c0_6 = arith.constant 0 : index
    %c0_7 = arith.constant 0 : index
    %3 = vector.load %arg0[%c0_5, %c0_6, %c0_7] : memref<7x8x128xf32, #tpu.memory_space<vmem>>, vector<1x8x128xf32>
    %4 = vector.shape_cast %3 : vector<1x8x128xf32> to vector<8x128xf32>
    %cst = arith.constant dense<0.000000e+00> : vector<8x128xf32>
    %5 = tpu.matmul %0, %2, %cst {dimension_numbers = #tpu.dot_dimension_numbers<[1], [0], [0], [1], [0, 0, 1, 1], [], []>} : vector<8x32xf32>, vector<32x128xf32>, vector<8x128xf32> -> vector<8x128xf32>
    %6 = arith.addf %4, %5 : vector<8x128xf32>
    %7 = vector.extract_strided_slice %6 {offsets = [0, 0], sizes = [8, 32], strides = [1, 1]} : vector<8x128xf32> to vector<8x32xf32>
    %8 = arith.negf %7 : vector<8x32xf32>
    %9 = math.exp %8 : vector<8x32xf32>
    %cst_8 = arith.constant 1.000000e+00 : f32
    %10 = vector.broadcast %cst_8 : f32 to vector<8x32xf32>
    %11 = arith.addf %10, %9 : vector<8x32xf32>
    %12 = arith.divf %10, %11 : vector<8x32xf32>
    %13 = vector.extract_strided_slice %6 {offsets = [0, 32], sizes = [8, 32], strides = [1, 1]} : vector<8x128xf32> to vector<8x32xf32>
    %14 = arith.negf %13 : vector<8x32xf32>
    %15 = math.exp %14 : vector<8x32xf32>
    %cst_9 = arith.constant 1.000000e+00 : f32
    %16 = vector.broadcast %cst_9 : f32 to vector<8x32xf32>
    %17 = arith.addf %16, %15 : vector<8x32xf32>
    %18 = arith.divf %16, %17 : vector<8x32xf32>
    %19 = vector.extract_strided_slice %6 {offsets = [0, 64], sizes = [8, 32], strides = [1, 1]} : vector<8x128xf32> to vector<8x32xf32>
    %20 = math.tanh %19 : vector<8x32xf32>
    %21 = vector.extract_strided_slice %6 {offsets = [0, 96], sizes = [8, 32], strides = [1, 1]} : vector<8x128xf32> to vector<8x32xf32>
    %22 = arith.negf %21 : vector<8x32xf32>
    %23 = math.exp %22 : vector<8x32xf32>
    %cst_10 = arith.constant 1.000000e+00 : f32
    %24 = vector.broadcast %cst_10 : f32 to vector<8x32xf32>
    %25 = arith.addf %24, %23 : vector<8x32xf32>
    %26 = arith.divf %24, %25 : vector<8x32xf32>
    %27 = arith.mulf %18, %1 : vector<8x32xf32>
    %28 = arith.mulf %12, %20 : vector<8x32xf32>
    %29 = arith.addf %27, %28 : vector<8x32xf32>
    %30 = math.tanh %29 : vector<8x32xf32>
    %31 = arith.mulf %26, %30 : vector<8x32xf32>
    %c0_11 = arith.constant 0 : index
    %c0_12 = arith.constant 0 : index
    %c0_13 = arith.constant 0 : index
    %32 = vector.load %arg9[%c0_11, %c0_12, %c0_13] : memref<7x8x32xf32, #tpu.memory_space<vmem>>, vector<1x8x32xf32>
    %33 = vector.shape_cast %32 : vector<1x8x32xf32> to vector<8x32xf32>
    %34 = vector.shape_cast %31 : vector<8x32xf32> to vector<1x8x32xf32>
    tpu.vector_store %arg9[%c0_11, %c0_12, %c0_13], %34 {strides = array<i32>} : memref<7x8x32xf32, #tpu.memory_space<vmem>>, vector<1x8x32xf32>,
    %c1 = arith.constant 1 : index
    %c0_14 = arith.constant 0 : index
    %c0_15 = arith.constant 0 : index
    %35 = vector.load %arg0[%c1, %c0_14, %c0_15] : memref<7x8x128xf32, #tpu.memory_space<vmem>>, vector<1x8x128xf32>
    %36 = vector.shape_cast %35 : vector<1x8x128xf32> to vector<8x128xf32>
    %cst_16 = arith.constant dense<0.000000e+00> : vector<8x128xf32>
    %37 = tpu.matmul %31, %2, %cst_16 {dimension_numbers = #tpu.dot_dimension_numbers<[1], [0], [0], [1], [0, 0, 1, 1], [], []>} : vector<8x32xf32>, vector<32x128xf32>, vector<8x128xf32> -> vector<8x128xf32>
    %38 = arith.addf %36, %37 : vector<8x128xf32>
    %39 = vector.extract_strided_slice %38 {offsets = [0, 0], sizes = [8, 32], strides = [1, 1]} : vector<8x128xf32> to vector<8x32xf32>
    %40 = arith.negf %39 : vector<8x32xf32>
    %41 = math.exp %40 : vector<8x32xf32>
    %cst_17 = arith.constant 1.000000e+00 : f32
    %42 = vector.broadcast %cst_17 : f32 to vector<8x32xf32>
    %43 = arith.addf %42, %41 : vector<8x32xf32>
    %44 = arith.divf %42, %43 : vector<8x32xf32>
    %45 = vector.extract_strided_slice %38 {offsets = [0, 32], sizes = [8, 32], strides = [1, 1]} : vector<8x128xf32> to vector<8x32xf32>
    %46 = arith.negf %45 : vector<8x32xf32>
    %47 = math.exp %46 : vector<8x32xf32>
    %cst_18 = arith.constant 1.000000e+00 : f32
    %48 = vector.broadcast %cst_18 : f32 to vector<8x32xf32>
    %49 = arith.addf %48, %47 : vector<8x32xf32>
    %50 = arith.divf %48, %49 : vector<8x32xf32>
    %51 = vector.extract_strided_slice %38 {offsets = [0, 64], sizes = [8, 32], strides = [1, 1]} : vector<8x128xf32> to vector<8x32xf32>
    %52 = math.tanh %51 : vector<8x32xf32>
    %53 = vector.extract_strided_slice %38 {offsets = [0, 96], sizes = [8, 32], strides = [1, 1]} : vector<8x128xf32> to vector<8x32xf32>
    %54 = arith.negf %53 : vector<8x32xf32>
    %55 = math.exp %54 : vector<8x32xf32>
    %cst_19 = arith.constant 1.000000e+00 : f32
    %56 = vector.broadcast %cst_19 : f32 to vector<8x32xf32>
    %57 = arith.addf %56, %55 : vector<8x32xf32>
    %58 = arith.divf %56, %57 : vector<8x32xf32>
    %59 = arith.mulf %50, %29 : vector<8x32xf32>
    %60 = arith.mulf %44, %52 : vector<8x32xf32>
    %61 = arith.addf %59, %60 : vector<8x32xf32>
    %62 = math.tanh %61 : vector<8x32xf32>
    %63 = arith.mulf %58, %62 : vector<8x32xf32>
    %c1_20 = arith.constant 1 : index
    %c0_21 = arith.constant 0 : index
    %c0_22 = arith.constant 0 : index
    %64 = vector.load %arg9[%c1_20, %c0_21, %c0_22] : memref<7x8x32xf32, #tpu.memory_space<vmem>>, vector<1x8x32xf32>
    %65 = vector.shape_cast %64 : vector<1x8x32xf32> to vector<8x32xf32>
    %66 = vector.shape_cast %63 : vector<8x32xf32> to vector<1x8x32xf32>
    tpu.vector_store %arg9[%c1_20, %c0_21, %c0_22], %66 {strides = array<i32>} : memref<7x8x32xf32, #tpu.memory_space<vmem>>, vector<1x8x32xf32>,
    %c2 = arith.constant 2 : index
    %c0_23 = arith.constant 0 : index
    %c0_24 = arith.constant 0 : index
    %67 = vector.load %arg0[%c2, %c0_23, %c0_24] : memref<7x8x128xf32, #tpu.memory_space<vmem>>, vector<1x8x128xf32>
    %68 = vector.shape_cast %67 : vector<1x8x128xf32> to vector<8x128xf32>
    %cst_25 = arith.constant dense<0.000000e+00> : vector<8x128xf32>
    %69 = tpu.matmul %63, %2, %cst_25 {dimension_numbers = #tpu.dot_dimension_numbers<[1], [0], [0], [1], [0, 0, 1, 1], [], []>} : vector<8x32xf32>, vector<32x128xf32>, vector<8x128xf32> -> vector<8x128xf32>
    %70 = arith.addf %68, %69 : vector<8x128xf32>
    %71 = vector.extract_strided_slice %70 {offsets = [0, 0], sizes = [8, 32], strides = [1, 1]} : vector<8x128xf32> to vector<8x32xf32>
    %72 = arith.negf %71 : vector<8x32xf32>
    %73 = math.exp %72 : vector<8x32xf32>
    %cst_26 = arith.constant 1.000000e+00 : f32
    %74 = vector.broadcast %cst_26 : f32 to vector<8x32xf32>
    %75 = arith.addf %74, %73 : vector<8x32xf32>
    %76 = arith.divf %74, %75 : vector<8x32xf32>
    %77 = vector.extract_strided_slice %70 {offsets = [0, 32], sizes = [8, 32], strides = [1, 1]} : vector<8x128xf32> to vector<8x32xf32>
    %78 = arith.negf %77 : vector<8x32xf32>
    %79 = math.exp %78 : vector<8x32xf32>
    %cst_27 = arith.constant 1.000000e+00 : f32
    %80 = vector.broadcast %cst_27 : f32 to vector<8x32xf32>
    %81 = arith.addf %80, %79 : vector<8x32xf32>
    %82 = arith.divf %80, %81 : vector<8x32xf32>
    %83 = vector.extract_strided_slice %70 {offsets = [0, 64], sizes = [8, 32], strides = [1, 1]} : vector<8x128xf32> to vector<8x32xf32>
    %84 = math.tanh %83 : vector<8x32xf32>
    %85 = vector.extract_strided_slice %70 {offsets = [0, 96], sizes = [8, 32], strides = [1, 1]} : vector<8x128xf32> to vector<8x32xf32>
    %86 = arith.negf %85 : vector<8x32xf32>
    %87 = math.exp %86 : vector<8x32xf32>
    %cst_28 = arith.constant 1.000000e+00 : f32
    %88 = vector.broadcast %cst_28 : f32 to vector<8x32xf32>
    %89 = arith.addf %88, %87 : vector<8x32xf32>
    %90 = arith.divf %88, %89 : vector<8x32xf32>
    %91 = arith.mulf %82, %61 : vector<8x32xf32>
    %92 = arith.mulf %76, %84 : vector<8x32xf32>
    %93 = arith.addf %91, %92 : vector<8x32xf32>
    %94 = math.tanh %93 : vector<8x32xf32>
    %95 = arith.mulf %90, %94 : vector<8x32xf32>
    %c2_29 = arith.constant 2 : index
    %c0_30 = arith.constant 0 : index
    %c0_31 = arith.constant 0 : index
    %96 = vector.load %arg9[%c2_29, %c0_30, %c0_31] : memref<7x8x32xf32, #tpu.memory_space<vmem>>, vector<1x8x32xf32>
    %97 = vector.shape_cast %96 : vector<1x8x32xf32> to vector<8x32xf32>
    %98 = vector.shape_cast %95 : vector<8x32xf32> to vector<1x8x32xf32>
    tpu.vector_store %arg9[%c2_29, %c0_30, %c0_31], %98 {strides = array<i32>} : memref<7x8x32xf32, #tpu.memory_space<vmem>>, vector<1x8x32xf32>,
    %c3 = arith.constant 3 : index
    %c0_32 = arith.constant 0 : index
    %c0_33 = arith.constant 0 : index
    %99 = vector.load %arg0[%c3, %c0_32, %c0_33] : memref<7x8x128xf32, #tpu.memory_space<vmem>>, vector<1x8x128xf32>
    %100 = vector.shape_cast %99 : vector<1x8x128xf32> to vector<8x128xf32>
    %cst_34 = arith.constant dense<0.000000e+00> : vector<8x128xf32>
    %101 = tpu.matmul %95, %2, %cst_34 {dimension_numbers = #tpu.dot_dimension_numbers<[1], [0], [0], [1], [0, 0, 1, 1], [], []>} : vector<8x32xf32>, vector<32x128xf32>, vector<8x128xf32> -> vector<8x128xf32>
    %102 = arith.addf %100, %101 : vector<8x128xf32>
    %103 = vector.extract_strided_slice %102 {offsets = [0, 0], sizes = [8, 32], strides = [1, 1]} : vector<8x128xf32> to vector<8x32xf32>
    %104 = arith.negf %103 : vector<8x32xf32>
    %105 = math.exp %104 : vector<8x32xf32>
    %cst_35 = arith.constant 1.000000e+00 : f32
    %106 = vector.broadcast %cst_35 : f32 to vector<8x32xf32>
    %107 = arith.addf %106, %105 : vector<8x32xf32>
    %108 = arith.divf %106, %107 : vector<8x32xf32>
    %109 = vector.extract_strided_slice %102 {offsets = [0, 32], sizes = [8, 32], strides = [1, 1]} : vector<8x128xf32> to vector<8x32xf32>
    %110 = arith.negf %109 : vector<8x32xf32>
    %111 = math.exp %110 : vector<8x32xf32>
    %cst_36 = arith.constant 1.000000e+00 : f32
    %112 = vector.broadcast %cst_36 : f32 to vector<8x32xf32>
    %113 = arith.addf %112, %111 : vector<8x32xf32>
    %114 = arith.divf %112, %113 : vector<8x32xf32>
    %115 = vector.extract_strided_slice %102 {offsets = [0, 64], sizes = [8, 32], strides = [1, 1]} : vector<8x128xf32> to vector<8x32xf32>
    %116 = math.tanh %115 : vector<8x32xf32>
    %117 = vector.extract_strided_slice %102 {offsets = [0, 96], sizes = [8, 32], strides = [1, 1]} : vector<8x128xf32> to vector<8x32xf32>
    %118 = arith.negf %117 : vector<8x32xf32>
    %119 = math.exp %118 : vector<8x32xf32>
    %cst_37 = arith.constant 1.000000e+00 : f32
    %120 = vector.broadcast %cst_37 : f32 to vector<8x32xf32>
    %121 = arith.addf %120, %119 : vector<8x32xf32>
    %122 = arith.divf %120, %121 : vector<8x32xf32>
    %123 = arith.mulf %114, %93 : vector<8x32xf32>
    %124 = arith.mulf %108, %116 : vector<8x32xf32>
    %125 = arith.addf %123, %124 : vector<8x32xf32>
    %126 = math.tanh %125 : vector<8x32xf32>
    %127 = arith.mulf %122, %126 : vector<8x32xf32>
    %c3_38 = arith.constant 3 : index
    %c0_39 = arith.constant 0 : index
    %c0_40 = arith.constant 0 : index
    %128 = vector.load %arg9[%c3_38, %c0_39, %c0_40] : memref<7x8x32xf32, #tpu.memory_space<vmem>>, vector<1x8x32xf32>
    %129 = vector.shape_cast %128 : vector<1x8x32xf32> to vector<8x32xf32>
    %130 = vector.shape_cast %127 : vector<8x32xf32> to vector<1x8x32xf32>
    tpu.vector_store %arg9[%c3_38, %c0_39, %c0_40], %130 {strides = array<i32>} : memref<7x8x32xf32, #tpu.memory_space<vmem>>, vector<1x8x32xf32>,
    %c4 = arith.constant 4 : index
    %c0_41 = arith.constant 0 : index
    %c0_42 = arith.constant 0 : index
    %131 = vector.load %arg0[%c4, %c0_41, %c0_42] : memref<7x8x128xf32, #tpu.memory_space<vmem>>, vector<1x8x128xf32>
    %132 = vector.shape_cast %131 : vector<1x8x128xf32> to vector<8x128xf32>
    %cst_43 = arith.constant dense<0.000000e+00> : vector<8x128xf32>
    %133 = tpu.matmul %127, %2, %cst_43 {dimension_numbers = #tpu.dot_dimension_numbers<[1], [0], [0], [1], [0, 0, 1, 1], [], []>} : vector<8x32xf32>, vector<32x128xf32>, vector<8x128xf32> -> vector<8x128xf32>
    %134 = arith.addf %132, %133 : vector<8x128xf32>
    %135 = vector.extract_strided_slice %134 {offsets = [0, 0], sizes = [8, 32], strides = [1, 1]} : vector<8x128xf32> to vector<8x32xf32>
    %136 = arith.negf %135 : vector<8x32xf32>
    %137 = math.exp %136 : vector<8x32xf32>
    %cst_44 = arith.constant 1.000000e+00 : f32
    %138 = vector.broadcast %cst_44 : f32 to vector<8x32xf32>
    %139 = arith.addf %138, %137 : vector<8x32xf32>
    %140 = arith.divf %138, %139 : vector<8x32xf32>
    %141 = vector.extract_strided_slice %134 {offsets = [0, 32], sizes = [8, 32], strides = [1, 1]} : vector<8x128xf32> to vector<8x32xf32>
    %142 = arith.negf %141 : vector<8x32xf32>
    %143 = math.exp %142 : vector<8x32xf32>
    %cst_45 = arith.constant 1.000000e+00 : f32
    %144 = vector.broadcast %cst_45 : f32 to vector<8x32xf32>
    %145 = arith.addf %144, %143 : vector<8x32xf32>
    %146 = arith.divf %144, %145 : vector<8x32xf32>
    %147 = vector.extract_strided_slice %134 {offsets = [0, 64], sizes = [8, 32], strides = [1, 1]} : vector<8x128xf32> to vector<8x32xf32>
    %148 = math.tanh %147 : vector<8x32xf32>
    %149 = vector.extract_strided_slice %134 {offsets = [0, 96], sizes = [8, 32], strides = [1, 1]} : vector<8x128xf32> to vector<8x32xf32>
    %150 = arith.negf %149 : vector<8x32xf32>
    %151 = math.exp %150 : vector<8x32xf32>
    %cst_46 = arith.constant 1.000000e+00 : f32
    %152 = vector.broadcast %cst_46 : f32 to vector<8x32xf32>
    %153 = arith.addf %152, %151 : vector<8x32xf32>
    %154 = arith.divf %152, %153 : vector<8x32xf32>
    %155 = arith.mulf %146, %125 : vector<8x32xf32>
    %156 = arith.mulf %140, %148 : vector<8x32xf32>
    %157 = arith.addf %155, %156 : vector<8x32xf32>
    %158 = math.tanh %157 : vector<8x32xf32>
    %159 = arith.mulf %154, %158 : vector<8x32xf32>
    %c4_47 = arith.constant 4 : index
    %c0_48 = arith.constant 0 : index
    %c0_49 = arith.constant 0 : index
    %160 = vector.load %arg9[%c4_47, %c0_48, %c0_49] : memref<7x8x32xf32, #tpu.memory_space<vmem>>, vector<1x8x32xf32>
    %161 = vector.shape_cast %160 : vector<1x8x32xf32> to vector<8x32xf32>
    %162 = vector.shape_cast %159 : vector<8x32xf32> to vector<1x8x32xf32>
    tpu.vector_store %arg9[%c4_47, %c0_48, %c0_49], %162 {strides = array<i32>} : memref<7x8x32xf32, #tpu.memory_space<vmem>>, vector<1x8x32xf32>,
    %c5 = arith.constant 5 : index
    %c0_50 = arith.constant 0 : index
    %c0_51 = arith.constant 0 : index
    %163 = vector.load %arg0[%c5, %c0_50, %c0_51] : memref<7x8x128xf32, #tpu.memory_space<vmem>>, vector<1x8x128xf32>
    %164 = vector.shape_cast %163 : vector<1x8x128xf32> to vector<8x128xf32>
    %cst_52 = arith.constant dense<0.000000e+00> : vector<8x128xf32>
    %165 = tpu.matmul %159, %2, %cst_52 {dimension_numbers = #tpu.dot_dimension_numbers<[1], [0], [0], [1], [0, 0, 1, 1], [], []>} : vector<8x32xf32>, vector<32x128xf32>, vector<8x128xf32> -> vector<8x128xf32>
    %166 = arith.addf %164, %165 : vector<8x128xf32>
    %167 = vector.extract_strided_slice %166 {offsets = [0, 0], sizes = [8, 32], strides = [1, 1]} : vector<8x128xf32> to vector<8x32xf32>
    %168 = arith.negf %167 : vector<8x32xf32>
    %169 = math.exp %168 : vector<8x32xf32>
    %cst_53 = arith.constant 1.000000e+00 : f32
    %170 = vector.broadcast %cst_53 : f32 to vector<8x32xf32>
    %171 = arith.addf %170, %169 : vector<8x32xf32>
    %172 = arith.divf %170, %171 : vector<8x32xf32>
    %173 = vector.extract_strided_slice %166 {offsets = [0, 32], sizes = [8, 32], strides = [1, 1]} : vector<8x128xf32> to vector<8x32xf32>
    %174 = arith.negf %173 : vector<8x32xf32>
    %175 = math.exp %174 : vector<8x32xf32>
    %cst_54 = arith.constant 1.000000e+00 : f32
    %176 = vector.broadcast %cst_54 : f32 to vector<8x32xf32>
    %177 = arith.addf %176, %175 : vector<8x32xf32>
    %178 = arith.divf %176, %177 : vector<8x32xf32>
    %179 = vector.extract_strided_slice %166 {offsets = [0, 64], sizes = [8, 32], strides = [1, 1]} : vector<8x128xf32> to vector<8x32xf32>
    %180 = math.tanh %179 : vector<8x32xf32>
    %181 = vector.extract_strided_slice %166 {offsets = [0, 96], sizes = [8, 32], strides = [1, 1]} : vector<8x128xf32> to vector<8x32xf32>
    %182 = arith.negf %181 : vector<8x32xf32>
    %183 = math.exp %182 : vector<8x32xf32>
    %cst_55 = arith.constant 1.000000e+00 : f32
    %184 = vector.broadcast %cst_55 : f32 to vector<8x32xf32>
    %185 = arith.addf %184, %183 : vector<8x32xf32>
    %186 = arith.divf %184, %185 : vector<8x32xf32>
    %187 = arith.mulf %178, %157 : vector<8x32xf32>
    %188 = arith.mulf %172, %180 : vector<8x32xf32>
    %189 = arith.addf %187, %188 : vector<8x32xf32>
    %190 = math.tanh %189 : vector<8x32xf32>
    %191 = arith.mulf %186, %190 : vector<8x32xf32>
    %c5_56 = arith.constant 5 : index
    %c0_57 = arith.constant 0 : index
    %c0_58 = arith.constant 0 : index
    %192 = vector.load %arg9[%c5_56, %c0_57, %c0_58] : memref<7x8x32xf32, #tpu.memory_space<vmem>>, vector<1x8x32xf32>
    %193 = vector.shape_cast %192 : vector<1x8x32xf32> to vector<8x32xf32>
    %194 = vector.shape_cast %191 : vector<8x32xf32> to vector<1x8x32xf32>
    tpu.vector_store %arg9[%c5_56, %c0_57, %c0_58], %194 {strides = array<i32>} : memref<7x8x32xf32, #tpu.memory_space<vmem>>, vector<1x8x32xf32>,
    %c6 = arith.constant 6 : index
    %c0_59 = arith.constant 0 : index
    %c0_60 = arith.constant 0 : index
    %195 = vector.load %arg0[%c6, %c0_59, %c0_60] : memref<7x8x128xf32, #tpu.memory_space<vmem>>, vector<1x8x128xf32>
    %196 = vector.shape_cast %195 : vector<1x8x128xf32> to vector<8x128xf32>
    %cst_61 = arith.constant dense<0.000000e+00> : vector<8x128xf32>
    %197 = tpu.matmul %191, %2, %cst_61 {dimension_numbers = #tpu.dot_dimension_numbers<[1], [0], [0], [1], [0, 0, 1, 1], [], []>} : vector<8x32xf32>, vector<32x128xf32>, vector<8x128xf32> -> vector<8x128xf32>
    %198 = arith.addf %196, %197 : vector<8x128xf32>
    %199 = vector.extract_strided_slice %198 {offsets = [0, 0], sizes = [8, 32], strides = [1, 1]} : vector<8x128xf32> to vector<8x32xf32>
    %200 = arith.negf %199 : vector<8x32xf32>
    %201 = math.exp %200 : vector<8x32xf32>
    %cst_62 = arith.constant 1.000000e+00 : f32
    %202 = vector.broadcast %cst_62 : f32 to vector<8x32xf32>
    %203 = arith.addf %202, %201 : vector<8x32xf32>
    %204 = arith.divf %202, %203 : vector<8x32xf32>
    %205 = vector.extract_strided_slice %198 {offsets = [0, 32], sizes = [8, 32], strides = [1, 1]} : vector<8x128xf32> to vector<8x32xf32>
    %206 = arith.negf %205 : vector<8x32xf32>
    %207 = math.exp %206 : vector<8x32xf32>
    %cst_63 = arith.constant 1.000000e+00 : f32
    %208 = vector.broadcast %cst_63 : f32 to vector<8x32xf32>
    %209 = arith.addf %208, %207 : vector<8x32xf32>
    %210 = arith.divf %208, %209 : vector<8x32xf32>
    %211 = vector.extract_strided_slice %198 {offsets = [0, 64], sizes = [8, 32], strides = [1, 1]} : vector<8x128xf32> to vector<8x32xf32>
    %212 = math.tanh %211 : vector<8x32xf32>
    %213 = vector.extract_strided_slice %198 {offsets = [0, 96], sizes = [8, 32], strides = [1, 1]} : vector<8x128xf32> to vector<8x32xf32>
    %214 = arith.negf %213 : vector<8x32xf32>
    %215 = math.exp %214 : vector<8x32xf32>
    %cst_64 = arith.constant 1.000000e+00 : f32
    %216 = vector.broadcast %cst_64 : f32 to vector<8x32xf32>
    %217 = arith.addf %216, %215 : vector<8x32xf32>
    %218 = arith.divf %216, %217 : vector<8x32xf32>
    %219 = arith.mulf %210, %189 : vector<8x32xf32>
    %220 = arith.mulf %204, %212 : vector<8x32xf32>
    %221 = arith.addf %219, %220 : vector<8x32xf32>
    %222 = math.tanh %221 : vector<8x32xf32>
    %223 = arith.mulf %218, %222 : vector<8x32xf32>
    %c6_65 = arith.constant 6 : index
    %c0_66 = arith.constant 0 : index
    %c0_67 = arith.constant 0 : index
    %224 = vector.load %arg9[%c6_65, %c0_66, %c0_67] : memref<7x8x32xf32, #tpu.memory_space<vmem>>, vector<1x8x32xf32>
    %225 = vector.shape_cast %224 : vector<1x8x32xf32> to vector<8x32xf32>
    %226 = vector.shape_cast %223 : vector<8x32xf32> to vector<1x8x32xf32>
    tpu.vector_store %arg9[%c6_65, %c0_66, %c0_67], %226 {strides = array<i32>} : memref<7x8x32xf32, #tpu.memory_space<vmem>>, vector<1x8x32xf32>,
    %c0_68 = arith.constant 0 : index
    %c0_69 = arith.constant 0 : index
    %227 = vector.load %arg7[%c0_68, %c0_69] : memref<8x32xf32, #tpu.memory_space<vmem>>, vector<8x32xf32>
    tpu.vector_store %arg7[%c0_68, %c0_69], %223 {strides = array<i32>} : memref<8x32xf32, #tpu.memory_space<vmem>>, vector<8x32xf32>,
    %c0_70 = arith.constant 0 : index
    %c0_71 = arith.constant 0 : index
    %228 = vector.load %arg8[%c0_70, %c0_71] : memref<8x32xf32, #tpu.memory_space<vmem>>, vector<8x32xf32>
    tpu.vector_store %arg8[%c0_70, %c0_71], %221 {strides = array<i32>} : memref<8x32xf32, #tpu.memory_space<vmem>>, vector<8x32xf32>,
    %c0_72 = arith.constant 0 : index
    %c0_73 = arith.constant 0 : index
    %c0_74 = arith.constant 0 : index
    %229 = vector.load %arg9[%c0_72, %c0_73, %c0_74] : memref<7x8x32xf32, #tpu.memory_space<vmem>>, vector<7x8x32xf32>
    %c0_75 = arith.constant 0 : index
    %c0_76 = arith.constant 0 : index
    %c0_77 = arith.constant 0 : index
    %230 = vector.load %arg2[%c0_75, %c0_76, %c0_77] : memref<7x32x128xf32, #tpu.memory_space<vmem>>, vector<7x32x128xf32>
    "tpu.trace_start"() <{level = 10 : i32, message = "sbh,shn->sbn"}> : () -> ()
    %cst_78 = arith.constant dense<0.000000e+00> : vector<7x8x128xf32>
    %231 = tpu.matmul %229, %230, %cst_78 {dimension_numbers = #tpu.dot_dimension_numbers<[2], [1], [1], [2], [0, 0, 0, 1, 1, 2], [0], [0]>} : vector<7x8x32xf32>, vector<7x32x128xf32>, vector<7x8x128xf32> -> vector<7x8x128xf32>
    "tpu.trace_stop"() : () -> ()
    %c0_79 = arith.constant 0 : index
    %c0_80 = arith.constant 0 : index
    %c0_81 = arith.constant 0 : index
    %232 = vector.load %arg3[%c0_79, %c0_80, %c0_81] : memref<7x8x128xf32, #tpu.memory_space<vmem>>, vector<7x8x128xf32>
    %233 = arith.addf %231, %232 : vector<7x8x128xf32>
    %234 = math.tanh %233 : vector<7x8x128xf32>
    %cst_82 = arith.constant 2.500000e+00 : f32
    %235 = vector.broadcast %cst_82 : f32 to vector<7x8x128xf32>
    %236 = arith.mulf %235, %234 : vector<7x8x128xf32>
    %c0_83 = arith.constant 0 : index
    %c0_84 = arith.constant 0 : index
    %c0_85 = arith.constant 0 : index
    %237 = vector.load %arg6[%c0_83, %c0_84, %c0_85] : memref<7x8x128xf32, #tpu.memory_space<vmem>>, vector<7x8x128xf32>
    tpu.vector_store %arg6[%c0_83, %c0_84, %c0_85], %236 {strides = array<i32>} : memref<7x8x128xf32, #tpu.memory_space<vmem>>, vector<7x8x128xf32>,
    return
  }
}

</mosaic_0001>

<llo_original>
// kernel: controller_fused.1
$region0: #{controller_fused.1}
  #allocation0 [shape = 'u32[]', space=smem, size = 0x4, offset = 0x4, fixed_abs, tag = 'smem constant byte address 0x4 - core index']
  #allocation1 [shape = 'u32[72,128]{1,0:T(1,128)}', space=vmem, size = 0x9000, scoped, tag = 'internal scratch']
  #allocation2 [shape = 'f32[7,8,32]{2,1,0:T(8,128)}', space=vmem, size = 0x7000, scoped, tag = 'scratch operand']
  %s0 = inlined_call_operand.vmem [shape: f32[7,8,128], index: 0, kind: input, shape index: {}]
  %s1 = inlined_call_operand.vmem [shape: f32[32,128], index: 1, kind: input, shape index: {}]
  %s2 = inlined_call_operand.hbm [shape: f32[7,32,128], index: 2, kind: input, shape index: {}]
  %s3 = inlined_call_operand.vmem [shape: f32[7,8,128], index: 3, kind: input, shape index: {}]
  %s4 = inlined_call_operand.vmem [shape: f32[8,32], index: 4, kind: input, shape index: {}]
  %s5 = inlined_call_operand.vmem [shape: f32[8,32], index: 5, kind: input, shape index: {}]
  %s6 = inlined_call_operand.vmem [shape: f32[7,8,128], index: 6, kind: output, shape index: {0}]
  %s7 = inlined_call_operand.vmem [shape: f32[8,32], index: 7, kind: output, shape index: {1}]
  %s8 = inlined_call_operand.vmem [shape: f32[8,32], index: 8, kind: output, shape index: {2}]
  %9 = xla_tuple %s6, %s7, %s8
  %s10 = sld [smem:[#allocation0]]
  $region54: #{controller_fused.1} parent=0
    _
  %s12 = ssub.s32 1, %s10
  %s13 = scalar_select 0, %s12, %s10
  $region1: #{controller_fused.1} parent=0
    #allocation3 [shape = 'u8[114688]{0}', space=vmem, size = 0x1c000, scoped, tag = 'input window, operand 2, single buffered']
    #allocation4 [shape = 's32[1]{0}', space=sflag, size = 0x4, scoped, tag = 'scoped memory for controller_fused.1']
    %14 = vsyncpa [#allocation4], 0
    // Predicated region
    $region2: #{controller_fused.1} parent=1 // pred_check
      _
    $region3: #{controller_fused.1} parent=1 // pred_check_branch
      %16 = sbr.rel (0) target = $region5
    $region4: #{controller_fused.1} parent=1 // pred_region
      _
    $region5: #{controller_fused.1} parent=1 // pred_fallthru
      _
    // Predicated region
    $region6: #{controller_fused.1} parent=1 // pred_check
      _
    $region7: #{controller_fused.1} parent=1 // pred_check_branch
      %18 = sbr.rel (0) target = $region9
    $region8: #{controller_fused.1} parent=1 // pred_region
      _
    $region9: #{controller_fused.1} parent=1 // pred_fallthru
      _
    // Predicated region
    $region10: #{controller_fused.1} parent=1 // pred_check
      _
    $region11: #{controller_fused.1} parent=1 // pred_check_branch
      %20 = sbr.rel (0) target = $region13
    $region12: #{controller_fused.1} parent=1 // pred_region
      %22 = vsyncadd [#allocation4], 0
      %s23 = sshll.u32 %s2, 4
      %s24 = int_to_ptr.hbm [resolvable:$true] %s23
      %s25 = sshll.u32 [#allocation3], 4
      %s26 = int_to_ptr.vmem [resolvable:$true] %s25
      %31 = dma.hbm_to_vmem [thread:$0]  %s24, 3584, %s26, [#allocation4], 128, 128, 8
    $region13: #{controller_fused.1} parent=1 // pred_fallthru
      _
    // Predicated region
    $region14: #{controller_fused.1} parent=1 // pred_check
      _
    $region15: #{controller_fused.1} parent=1 // pred_check_branch
      %33 = sbr.rel (0) target = $region17
    $region16: #{controller_fused.1} parent=1 // pred_region
      _
    $region17: #{controller_fused.1} parent=1 // pred_fallthru
      _
    // Predicated region
    $region18: #{controller_fused.1} parent=1 // pred_check
      _
    $region19: #{controller_fused.1} parent=1 // pred_check_branch
      %35 = sbr.rel (0) target = $region21
    $region20: #{controller_fused.1} parent=1 // pred_region
      _
    $region21: #{controller_fused.1} parent=1 // pred_fallthru
      _
    // Predicated region
    $region22: #{controller_fused.1} parent=1 // pred_check
      _
    $region23: #{controller_fused.1} parent=1 // pred_check_branch
      %37 = sbr.rel (0) target = $region25
    $region24: #{controller_fused.1} parent=1 // pred_region
      _
    $region25: #{controller_fused.1} parent=1 // pred_fallthru
      _
    // Predicated region
    $region26: #{controller_fused.1} parent=1 // pred_check
      _
    $region27: #{controller_fused.1} parent=1 // pred_check_branch
      %39 = sbr.rel (0) target = $region29
    $region28: #{controller_fused.1} parent=1 // pred_region
      %41 = dma.done [#allocation4], 3584
    $region29: #{controller_fused.1} parent=1 // pred_fallthru
      _
    %v42 = vld [vmem:[%s4] sm:$0xff]
    %v43 = vld [vmem:[%s5] sm:$0xff]
    %v44 = vld [vmem:[%s1] sm:$0xff]
    %v45 = vld [vmem:[%s1 + $0x8] sm:$0xff]
    %v46 = vld [vmem:[%s1 + $0x10] sm:$0xff]
    %v47 = vld [vmem:[%s1 + $0x18] sm:$0xff]
    %v48 = vld [vmem:[%s0] sm:$0xff]
    %vm49 = vcmask 261120
    %v51 = vsel %vm49, %v42, 0
    %53 = vmatpush.msra.mxu0 0.0
    %54 = vmatpush.msra.mxu0 0.0
    %55 = vmatpush.msra.mxu0 0.0
    %56 = vmatpush.msra.mxu0 0.0
    %57 = vmatpush.msra.mxu0 0.0
    %58 = vmatpush.msra.mxu0 0.0
    %59 = vmatpush.msra.mxu0 0.0
    %60 = vmatpush.msra.mxu0 0.0
    %61 = vmatpush.msra.mxu0 0.0
    %62 = vmatpush.msra.mxu0 0.0
    %63 = vmatpush.msra.mxu0 0.0
    %64 = vmatpush.msra.mxu0 0.0
    %65 = vmatpush.msra.mxu0 %v47
    %66 = vmatpush.msra.mxu0 %v46
    %67 = vmatpush.msra.mxu0 %v45
    %68 = vmatpush.msra.mxu0 %v44
    %69 = vmatmul.f32.gmra.mxu0 %v51
    %v70 = vpop.f32.mrf.mxu0
    %v71 = vadd.f32 0.0, %v70
    %72 = vdwg.mxu0
    %v73 = vadd.f32 %v48, %v71
    %v74 = vxor.u32 %v73, 2147483648
    %v75 = vmul.f32 %v74, 1.442695
    %v76 = vpow.pop %v75
    %v77 = vadd.f32 %v76, 1.0
    %v78 = vrcp.pop %v77
    %v79 = vmul.f32 %v77, %v78
    %v80 = vsub.f32 1.0, %v79
    %v81 = vmul.f32 %v78, %v80
    %v82 = vadd.f32 %v78, %v81
    %vm83 = vweird.f32 %v77
    %vm84 = vweird.f32 %v78
    %vm85 = vmor %vm83, %vm84
    %v86 = vsel %vm85, %v78, %v82
    %v87 = vand.u32 2147483647, %v77
    %vm88 = vcmp.eq.f32.partialorder %v87, 8.507059e+37
    %v89 = vand.u32 %v77, 2147483648
    %v90 = vor.u32 1.1754944e-38, %v89
    %v91 = vsel %vm88, %v90, %v86
    %v92 = vmul.f32 1.0, %v91
    %v93 = vtanh.pop %v73
    %95 = vrot.lane.b32.xlu0 %v43, 32
    %v96 = vpop.permute.xlu0 %95
    %v98 = vmul.f32 %v92, %v96
    %100 = vrot.lane.b32.xlu0 %v93, 64
    %v101 = vpop.permute.xlu0 %100
    %v103 = vmul.f32 %v92, %v101
    %105 = vrot.lane.b32.xlu0 %v103, 32
    %v106 = vpop.permute.xlu0 %105
    %v108 = vadd.f32 %v98, %v106
    %v109 = vtanh.pop %v108
    %111 = vrot.lane.b32.xlu0 %v109, 64
    %v112 = vpop.permute.xlu0 %111
    %v114 = vmul.f32 %v92, %v112
    %116 = vrot.lane.b32.xlu0 %v114, 32
    %v117 = vpop.permute.xlu0 %116
    %119 = vst.msk [vmem:[#allocation2] sm:$0xff] %vm49, %v117
    %s120 = scalar_lea.vmem %s0, 8
    %v121 = vld [vmem:[%s120] sm:$0xff]
    %v122 = vsel %vm49, %v117, 0
    %124 = vmatpush.msra.mxu0 0.0
    %125 = vmatpush.msra.mxu0 0.0
    %126 = vmatpush.msra.mxu0 0.0
    %127 = vmatpush.msra.mxu0 0.0
    %128 = vmatpush.msra.mxu0 0.0
    %129 = vmatpush.msra.mxu0 0.0
    %130 = vmatpush.msra.mxu0 0.0
    %131 = vmatpush.msra.mxu0 0.0
    %132 = vmatpush.msra.mxu0 0.0
    %133 = vmatpush.msra.mxu0 0.0
    %134 = vmatpush.msra.mxu0 0.0
    %135 = vmatpush.msra.mxu0 0.0
    %136 = vmatpush.msra.mxu0 %v47
    %137 = vmatpush.msra.mxu0 %v46
    %138 = vmatpush.msra.mxu0 %v45
    %139 = vmatpush.msra.mxu0 %v44
    %140 = vmatmul.f32.gmra.mxu0 %v122
    %v141 = vpop.f32.mrf.mxu0
    %v142 = vadd.f32 0.0, %v141
    %143 = vdwg.mxu0
    %v144 = vadd.f32 %v121, %v142
    %v145 = vxor.u32 %v144, 2147483648
    %v146 = vmul.f32 %v145, 1.442695
    %v147 = vpow.pop %v146
    %v148 = vadd.f32 %v147, 1.0
    %v149 = vrcp.pop %v148
    %v150 = vmul.f32 %v148, %v149
    %v151 = vsub.f32 1.0, %v150
    %v152 = vmul.f32 %v149, %v151
    %v153 = vadd.f32 %v149, %v152
    %vm154 = vweird.f32 %v148
    %vm155 = vweird.f32 %v149
    %vm156 = vmor %vm154, %vm155
    %v157 = vsel %vm156, %v149, %v153
    %v158 = vand.u32 2147483647, %v148
    %vm159 = vcmp.eq.f32.partialorder %v158, 8.507059e+37
    %v160 = vand.u32 %v148, 2147483648
    %v161 = vor.u32 1.1754944e-38, %v160
    %v162 = vsel %vm159, %v161, %v157
    %v163 = vmul.f32 1.0, %v162
    %v164 = vtanh.pop %v144
    %v165 = vmul.f32 %v163, %v108
    %167 = vrot.lane.b32.xlu0 %v164, 64
    %v168 = vpop.permute.xlu0 %167
    %v170 = vmul.f32 %v163, %v168
    %172 = vrot.lane.b32.xlu0 %v170, 32
    %v173 = vpop.permute.xlu0 %172
    %v175 = vadd.f32 %v165, %v173
    %v176 = vtanh.pop %v175
    %178 = vrot.lane.b32.xlu0 %v176, 64
    %v179 = vpop.permute.xlu0 %178
    %v181 = vmul.f32 %v163, %v179
    %183 = vrot.lane.b32.xlu0 %v181, 32
    %v184 = vpop.permute.xlu0 %183
    %s186 = scalar_lea.vmem [#allocation2], 8
    %187 = vst.msk [vmem:[%s186] sm:$0xff] %vm49, %v184
    %s188 = scalar_lea.vmem %s0, 16
    %v189 = vld [vmem:[%s188] sm:$0xff]
    %v190 = vsel %vm49, %v184, 0
    %192 = vmatpush.msra.mxu0 0.0
    %193 = vmatpush.msra.mxu0 0.0
    %194 = vmatpush.msra.mxu0 0.0
    %195 = vmatpush.msra.mxu0 0.0
    %196 = vmatpush.msra.mxu0 0.0
    %197 = vmatpush.msra.mxu0 0.0
    %198 = vmatpush.msra.mxu0 0.0
    %199 = vmatpush.msra.mxu0 0.0
    %200 = vmatpush.msra.mxu0 0.0
    %201 = vmatpush.msra.mxu0 0.0
    %202 = vmatpush.msra.mxu0 0.0
    %203 = vmatpush.msra.mxu0 0.0
    %204 = vmatpush.msra.mxu0 %v47
    %205 = vmatpush.msra.mxu0 %v46
    %206 = vmatpush.msra.mxu0 %v45
    %207 = vmatpush.msra.mxu0 %v44
    %208 = vmatmul.f32.gmra.mxu0 %v190
    %v209 = vpop.f32.mrf.mxu0
    %v210 = vadd.f32 0.0, %v209
    %211 = vdwg.mxu0
    %v212 = vadd.f32 %v189, %v210
    %v213 = vxor.u32 %v212, 2147483648
    %v214 = vmul.f32 %v213, 1.442695
    %v215 = vpow.pop %v214
    %v216 = vadd.f32 %v215, 1.0
    %v217 = vrcp.pop %v216
    %v218 = vmul.f32 %v216, %v217
    %v219 = vsub.f32 1.0, %v218
    %v220 = vmul.f32 %v217, %v219
    %v221 = vadd.f32 %v217, %v220
    %vm222 = vweird.f32 %v216
    %vm223 = vweird.f32 %v217
    %vm224 = vmor %vm222, %vm223
    %v225 = vsel %vm224, %v217, %v221
    %v226 = vand.u32 2147483647, %v216
    %vm227 = vcmp.eq.f32.partialorder %v226, 8.507059e+37
    %v228 = vand.u32 %v216, 2147483648
    %v229 = vor.u32 1.1754944e-38, %v228
    %v230 = vsel %vm227, %v229, %v225
    %v231 = vmul.f32 1.0, %v230
    %v232 = vtanh.pop %v212
    %v233 = vmul.f32 %v231, %v175
    %235 = vrot.lane.b32.xlu0 %v232, 64
    %v236 = vpop.permute.xlu0 %235
    %v238 = vmul.f32 %v231, %v236
    %240 = vrot.lane.b32.xlu0 %v238, 32
    %v241 = vpop.permute.xlu0 %240
    %v243 = vadd.f32 %v233, %v241
    %v244 = vtanh.pop %v243
    %246 = vrot.lane.b32.xlu0 %v244, 64
    %v247 = vpop.permute.xlu0 %246
    %v249 = vmul.f32 %v231, %v247
    %251 = vrot.lane.b32.xlu0 %v249, 32
    %v252 = vpop.permute.xlu0 %251
    %s254 = scalar_lea.vmem [#allocation2], 16
    %255 = vst.msk [vmem:[%s254] sm:$0xff] %vm49, %v252
    %s256 = scalar_lea.vmem %s0, 24
    %v257 = vld [vmem:[%s256] sm:$0xff]
    %v258 = vsel %vm49, %v252, 0
    %260 = vmatpush.msra.mxu0 0.0
    %261 = vmatpush.msra.mxu0 0.0
    %262 = vmatpush.msra.mxu0 0.0
    %263 = vmatpush.msra.mxu0 0.0
    %264 = vmatpush.msra.mxu0 0.0
    %265 = vmatpush.msra.mxu0 0.0
    %266 = vmatpush.msra.mxu0 0.0
    %267 = vmatpush.msra.mxu0 0.0
    %268 = vmatpush.msra.mxu0 0.0
    %269 = vmatpush.msra.mxu0 0.0
    %270 = vmatpush.msra.mxu0 0.0
    %271 = vmatpush.msra.mxu0 0.0
    %272 = vmatpush.msra.mxu0 %v47
    %273 = vmatpush.msra.mxu0 %v46
    %274 = vmatpush.msra.mxu0 %v45
    %275 = vmatpush.msra.mxu0 %v44
    %276 = vmatmul.f32.gmra.mxu0 %v258
    %v277 = vpop.f32.mrf.mxu0
    %v278 = vadd.f32 0.0, %v277
    %279 = vdwg.mxu0
    %v280 = vadd.f32 %v257, %v278
    %v281 = vxor.u32 %v280, 2147483648
    %v282 = vmul.f32 %v281, 1.442695
    %v283 = vpow.pop %v282
    %v284 = vadd.f32 %v283, 1.0
    %v285 = vrcp.pop %v284
    %v286 = vmul.f32 %v284, %v285
    %v287 = vsub.f32 1.0, %v286
    %v288 = vmul.f32 %v285, %v287
    %v289 = vadd.f32 %v285, %v288
    %vm290 = vweird.f32 %v284
    %vm291 = vweird.f32 %v285
    %vm292 = vmor %vm290, %vm291
    %v293 = vsel %vm292, %v285, %v289
    %v294 = vand.u32 2147483647, %v284
    %vm295 = vcmp.eq.f32.partialorder %v294, 8.507059e+37
    %v296 = vand.u32 %v284, 2147483648
    %v297 = vor.u32 1.1754944e-38, %v296
    %v298 = vsel %vm295, %v297, %v293
    %v299 = vmul.f32 1.0, %v298
    %v300 = vtanh.pop %v280
    %v301 = vmul.f32 %v299, %v243
    %303 = vrot.lane.b32.xlu0 %v300, 64
    %v304 = vpop.permute.xlu0 %303
    %v306 = vmul.f32 %v299, %v304
    %308 = vrot.lane.b32.xlu0 %v306, 32
    %v309 = vpop.permute.xlu0 %308
    %v311 = vadd.f32 %v301, %v309
    %v312 = vtanh.pop %v311
    %314 = vrot.lane.b32.xlu0 %v312, 64
    %v315 = vpop.permute.xlu0 %314
    %v317 = vmul.f32 %v299, %v315
    %319 = vrot.lane.b32.xlu0 %v317, 32
    %v320 = vpop.permute.xlu0 %319
    %s322 = scalar_lea.vmem [#allocation2], 24
    %323 = vst.msk [vmem:[%s322] sm:$0xff] %vm49, %v320
    %s324 = scalar_lea.vmem %s0, 32
    %v325 = vld [vmem:[%s324] sm:$0xff]
    %v326 = vsel %vm49, %v320, 0
    %328 = vmatpush.msra.mxu0 0.0
    %329 = vmatpush.msra.mxu0 0.0
    %330 = vmatpush.msra.mxu0 0.0
    %331 = vmatpush.msra.mxu0 0.0
    %332 = vmatpush.msra.mxu0 0.0
    %333 = vmatpush.msra.mxu0 0.0
    %334 = vmatpush.msra.mxu0 0.0
    %335 = vmatpush.msra.mxu0 0.0
    %336 = vmatpush.msra.mxu0 0.0
    %337 = vmatpush.msra.mxu0 0.0
    %338 = vmatpush.msra.mxu0 0.0
    %339 = vmatpush.msra.mxu0 0.0
    %340 = vmatpush.msra.mxu0 %v47
    %341 = vmatpush.msra.mxu0 %v46
    %342 = vmatpush.msra.mxu0 %v45
    %343 = vmatpush.msra.mxu0 %v44
    %344 = vmatmul.f32.gmra.mxu0 %v326
    %v345 = vpop.f32.mrf.mxu0
    %v346 = vadd.f32 0.0, %v345
    %347 = vdwg.mxu0
    %v348 = vadd.f32 %v325, %v346
    %v349 = vxor.u32 %v348, 2147483648
    %v350 = vmul.f32 %v349, 1.442695
    %v351 = vpow.pop %v350
    %v352 = vadd.f32 %v351, 1.0
    %v353 = vrcp.pop %v352
    %v354 = vmul.f32 %v352, %v353
    %v355 = vsub.f32 1.0, %v354
    %v356 = vmul.f32 %v353, %v355
    %v357 = vadd.f32 %v353, %v356
    %vm358 = vweird.f32 %v352
    %vm359 = vweird.f32 %v353
    %vm360 = vmor %vm358, %vm359
    %v361 = vsel %vm360, %v353, %v357
    %v362 = vand.u32 2147483647, %v352
    %vm363 = vcmp.eq.f32.partialorder %v362, 8.507059e+37
    %v364 = vand.u32 %v352, 2147483648
    %v365 = vor.u32 1.1754944e-38, %v364
    %v366 = vsel %vm363, %v365, %v361
    %v367 = vmul.f32 1.0, %v366
    %v368 = vtanh.pop %v348
    %v369 = vmul.f32 %v367, %v311
    %371 = vrot.lane.b32.xlu0 %v368, 64
    %v372 = vpop.permute.xlu0 %371
    %v374 = vmul.f32 %v367, %v372
    %376 = vrot.lane.b32.xlu0 %v374, 32
    %v377 = vpop.permute.xlu0 %376
    %v379 = vadd.f32 %v369, %v377
    %v380 = vtanh.pop %v379
    %382 = vrot.lane.b32.xlu0 %v380, 64
    %v383 = vpop.permute.xlu0 %382
    %v385 = vmul.f32 %v367, %v383
    %387 = vrot.lane.b32.xlu0 %v385, 32
    %v388 = vpop.permute.xlu0 %387
    %s390 = scalar_lea.vmem [#allocation2], 32
    %391 = vst.msk [vmem:[%s390] sm:$0xff] %vm49, %v388
    %s392 = scalar_lea.vmem %s0, 40
    %v393 = vld [vmem:[%s392] sm:$0xff]
    %v394 = vsel %vm49, %v388, 0
    %396 = vmatpush.msra.mxu0 0.0
    %397 = vmatpush.msra.mxu0 0.0
    %398 = vmatpush.msra.mxu0 0.0
    %399 = vmatpush.msra.mxu0 0.0
    %400 = vmatpush.msra.mxu0 0.0
    %401 = vmatpush.msra.mxu0 0.0
    %402 = vmatpush.msra.mxu0 0.0
    %403 = vmatpush.msra.mxu0 0.0
    %404 = vmatpush.msra.mxu0 0.0
    %405 = vmatpush.msra.mxu0 0.0
    %406 = vmatpush.msra.mxu0 0.0
    %407 = vmatpush.msra.mxu0 0.0
    %408 = vmatpush.msra.mxu0 %v47
    %409 = vmatpush.msra.mxu0 %v46
    %410 = vmatpush.msra.mxu0 %v45
    %411 = vmatpush.msra.mxu0 %v44
    %412 = vmatmul.f32.gmra.mxu0 %v394
    %v413 = vpop.f32.mrf.mxu0
    %v414 = vadd.f32 0.0, %v413
    %415 = vdwg.mxu0
    %v416 = vadd.f32 %v393, %v414
    %v417 = vxor.u32 %v416, 2147483648
    %v418 = vmul.f32 %v417, 1.442695
    %v419 = vpow.pop %v418
    %v420 = vadd.f32 %v419, 1.0
    %v421 = vrcp.pop %v420
    %v422 = vmul.f32 %v420, %v421
    %v423 = vsub.f32 1.0, %v422
    %v424 = vmul.f32 %v421, %v423
    %v425 = vadd.f32 %v421, %v424
    %vm426 = vweird.f32 %v420
    %vm427 = vweird.f32 %v421
    %vm428 = vmor %vm426, %vm427
    %v429 = vsel %vm428, %v421, %v425
    %v430 = vand.u32 2147483647, %v420
    %vm431 = vcmp.eq.f32.partialorder %v430, 8.507059e+37
    %v432 = vand.u32 %v420, 2147483648
    %v433 = vor.u32 1.1754944e-38, %v432
    %v434 = vsel %vm431, %v433, %v429
    %v435 = vmul.f32 1.0, %v434
    %v436 = vtanh.pop %v416
    %v437 = vmul.f32 %v435, %v379
    %439 = vrot.lane.b32.xlu0 %v436, 64
    %v440 = vpop.permute.xlu0 %439
    %v442 = vmul.f32 %v435, %v440
    %444 = vrot.lane.b32.xlu0 %v442, 32
    %v445 = vpop.permute.xlu0 %444
    %v447 = vadd.f32 %v437, %v445
    %v448 = vtanh.pop %v447
    %450 = vrot.lane.b32.xlu0 %v448, 64
    %v451 = vpop.permute.xlu0 %450
    %v453 = vmul.f32 %v435, %v451
    %455 = vrot.lane.b32.xlu0 %v453, 32
    %v456 = vpop.permute.xlu0 %455
    %s458 = scalar_lea.vmem [#allocation2], 40
    %459 = vst.msk [vmem:[%s458] sm:$0xff] %vm49, %v456
    %s460 = scalar_lea.vmem %s0, 48
    %v461 = vld [vmem:[%s460] sm:$0xff]
    %v462 = vsel %vm49, %v456, 0
    %464 = vmatpush.msra.mxu0 0.0
    %465 = vmatpush.msra.mxu0 0.0
    %466 = vmatpush.msra.mxu0 0.0
    %467 = vmatpush.msra.mxu0 0.0
    %468 = vmatpush.msra.mxu0 0.0
    %469 = vmatpush.msra.mxu0 0.0
    %470 = vmatpush.msra.mxu0 0.0
    %471 = vmatpush.msra.mxu0 0.0
    %472 = vmatpush.msra.mxu0 0.0
    %473 = vmatpush.msra.mxu0 0.0
    %474 = vmatpush.msra.mxu0 0.0
    %475 = vmatpush.msra.mxu0 0.0
    %476 = vmatpush.msra.mxu0 %v47
    %477 = vmatpush.msra.mxu0 %v46
    %478 = vmatpush.msra.mxu0 %v45
    %479 = vmatpush.msra.mxu0 %v44
    %480 = vmatmul.f32.gmra.mxu0 %v462
    %v481 = vpop.f32.mrf.mxu0
    %v482 = vadd.f32 0.0, %v481
    %483 = vdwg.mxu0
    %v484 = vadd.f32 %v461, %v482
    %v485 = vxor.u32 %v484, 2147483648
    %v486 = vmul.f32 %v485, 1.442695
    %v487 = vpow.pop %v486
    %v488 = vadd.f32 %v487, 1.0
    %v489 = vrcp.pop %v488
    %v490 = vmul.f32 %v488, %v489
    %v491 = vsub.f32 1.0, %v490
    %v492 = vmul.f32 %v489, %v491
    %v493 = vadd.f32 %v489, %v492
    %vm494 = vweird.f32 %v488
    %vm495 = vweird.f32 %v489
    %vm496 = vmor %vm494, %vm495
    %v497 = vsel %vm496, %v489, %v493
    %v498 = vand.u32 2147483647, %v488
    %vm499 = vcmp.eq.f32.partialorder %v498, 8.507059e+37
    %v500 = vand.u32 %v488, 2147483648
    %v501 = vor.u32 1.1754944e-38, %v500
    %v502 = vsel %vm499, %v501, %v497
    %v503 = vmul.f32 1.0, %v502
    %v504 = vtanh.pop %v484
    %v505 = vmul.f32 %v503, %v447
    %507 = vrot.lane.b32.xlu0 %v504, 64
    %v508 = vpop.permute.xlu0 %507
    %v510 = vmul.f32 %v503, %v508
    %512 = vrot.lane.b32.xlu0 %v510, 32
    %v513 = vpop.permute.xlu0 %512
    %v515 = vadd.f32 %v505, %v513
    %v516 = vtanh.pop %v515
    %518 = vrot.lane.b32.xlu0 %v516, 64
    %v519 = vpop.permute.xlu0 %518
    %v521 = vmul.f32 %v503, %v519
    %523 = vrot.lane.b32.xlu0 %v521, 32
    %v524 = vpop.permute.xlu0 %523
    %s526 = scalar_lea.vmem [#allocation2], 48
    %527 = vst.msk [vmem:[%s526] sm:$0xff] %vm49, %v524
    %528 = vst.msk [vmem:[%s7] sm:$0xff] %vm49, %v524
    %530 = vrot.lane.b32.xlu0 %v515, 96
    %v531 = vpop.permute.xlu0 %530
    %533 = vst.msk [vmem:[%s8] sm:$0xff] %vm49, %v531
    %v534 = vld [vmem:[#allocation2] sm:$0xff]
    %v535 = vld [vmem:[#allocation2 + $0x8] sm:$0xff]
    %v536 = vld [vmem:[#allocation2 + $0x10] sm:$0xff]
    %v537 = vld [vmem:[#allocation2 + $0x18] sm:$0xff]
    %v538 = vld [vmem:[#allocation2 + $0x20] sm:$0xff]
    %v539 = vld [vmem:[#allocation2 + $0x28] sm:$0xff]
    %v540 = vld [vmem:[#allocation2 + $0x30] sm:$0xff]
    %v541 = vld [vmem:[#allocation3] sm:$0xff]
    %v542 = vld [vmem:[#allocation3 + $0x8] sm:$0xff]
    %v543 = vld [vmem:[#allocation3 + $0x10] sm:$0xff]
    %v544 = vld [vmem:[#allocation3 + $0x18] sm:$0xff]
    %v545 = vld [vmem:[#allocation3 + $0x20] sm:$0xff]
    %v546 = vld [vmem:[#allocation3 + $0x28] sm:$0xff]
    %v547 = vld [vmem:[#allocation3 + $0x30] sm:$0xff]
    %v548 = vld [vmem:[#allocation3 + $0x38] sm:$0xff]
    %v549 = vld [vmem:[#allocation3 + $0x40] sm:$0xff]
    %v550 = vld [vmem:[#allocation3 + $0x48] sm:$0xff]
    %v551 = vld [vmem:[#allocation3 + $0x50] sm:$0xff]
    %v552 = vld [vmem:[#allocation3 + $0x58] sm:$0xff]
    %v553 = vld [vmem:[#allocation3 + $0x60] sm:$0xff]
    %v554 = vld [vmem:[#allocation3 + $0x68] sm:$0xff]
    %v555 = vld [vmem:[#allocation3 + $0x70] sm:$0xff]
    %v556 = vld [vmem:[#allocation3 + $0x78] sm:$0xff]
    %v557 = vld [vmem:[#allocation3 + $0x80] sm:$0xff]
    %v558 = vld [vmem:[#allocation3 + $0x88] sm:$0xff]
    %v559 = vld [vmem:[#allocation3 + $0x90] sm:$0xff]
    %v560 = vld [vmem:[#allocation3 + $0x98] sm:$0xff]
    %v561 = vld [vmem:[#allocation3 + $0xa0] sm:$0xff]
    %v562 = vld [vmem:[#allocation3 + $0xa8] sm:$0xff]
    %v563 = vld [vmem:[#allocation3 + $0xb0] sm:$0xff]
    %v564 = vld [vmem:[#allocation3 + $0xb8] sm:$0xff]
    %v565 = vld [vmem:[#allocation3 + $0xc0] sm:$0xff]
    %v566 = vld [vmem:[#allocation3 + $0xc8] sm:$0xff]
    %v567 = vld [vmem:[#allocation3 + $0xd0] sm:$0xff]
    %v568 = vld [vmem:[#allocation3 + $0xd8] sm:$0xff]
    %v569 = vld [vmem:[%s3] sm:$0xff]
    %v570 = vld [vmem:[%s3 + $0x8] sm:$0xff]
    %v571 = vld [vmem:[%s3 + $0x10] sm:$0xff]
    %v572 = vld [vmem:[%s3 + $0x18] sm:$0xff]
    %v573 = vld [vmem:[%s3 + $0x20] sm:$0xff]
    %v574 = vld [vmem:[%s3 + $0x28] sm:$0xff]
    %v575 = vld [vmem:[%s3 + $0x30] sm:$0xff]
    %v577 = vsel %vm49, %v534, 0
    %579 = vmatpush.msra.mxu0 0.0
    %580 = vmatpush.msra.mxu0 0.0
    %581 = vmatpush.msra.mxu0 0.0
    %582 = vmatpush.msra.mxu0 0.0
    %583 = vmatpush.msra.mxu0 0.0
    %584 = vmatpush.msra.mxu0 0.0
    %585 = vmatpush.msra.mxu0 0.0
    %586 = vmatpush.msra.mxu0 0.0
    %587 = vmatpush.msra.mxu0 0.0
    %588 = vmatpush.msra.mxu0 0.0
    %589 = vmatpush.msra.mxu0 0.0
    %590 = vmatpush.msra.mxu0 0.0
    %591 = vmatpush.msra.mxu0 %v544
    %592 = vmatpush.msra.mxu0 %v543
    %593 = vmatpush.msra.mxu0 %v542
    %594 = vmatpush.msra.mxu0 %v541
    %595 = vmatmul.f32.gmra.mxu0 %v577
    %v596 = vpop.f32.mrf.mxu0
    %v597 = vadd.f32 %v569, %v596
    %598 = vdwg.mxu0
    %v600 = vsel %vm49, %v535, 0
    %602 = vmatpush.msra.mxu0 0.0
    %603 = vmatpush.msra.mxu0 0.0
    %604 = vmatpush.msra.mxu0 0.0
    %605 = vmatpush.msra.mxu0 0.0
    %606 = vmatpush.msra.mxu0 0.0
    %607 = vmatpush.msra.mxu0 0.0
    %608 = vmatpush.msra.mxu0 0.0
    %609 = vmatpush.msra.mxu0 0.0
    %610 = vmatpush.msra.mxu0 0.0
    %611 = vmatpush.msra.mxu0 0.0
    %612 = vmatpush.msra.mxu0 0.0
    %613 = vmatpush.msra.mxu0 0.0
    %614 = vmatpush.msra.mxu0 %v548
    %615 = vmatpush.msra.mxu0 %v547
    %616 = vmatpush.msra.mxu0 %v546
    %617 = vmatpush.msra.mxu0 %v545
    %618 = vmatmul.f32.gmra.mxu0 %v600
    %v619 = vpop.f32.mrf.mxu0
    %v620 = vadd.f32 %v570, %v619
    %621 = vdwg.mxu0
    %v623 = vsel %vm49, %v536, 0
    %625 = vmatpush.msra.mxu0 0.0
    %626 = vmatpush.msra.mxu0 0.0
    %627 = vmatpush.msra.mxu0 0.0
    %628 = vmatpush.msra.mxu0 0.0
    %629 = vmatpush.msra.mxu0 0.0
    %630 = vmatpush.msra.mxu0 0.0
    %631 = vmatpush.msra.mxu0 0.0
    %632 = vmatpush.msra.mxu0 0.0
    %633 = vmatpush.msra.mxu0 0.0
    %634 = vmatpush.msra.mxu0 0.0
    %635 = vmatpush.msra.mxu0 0.0
    %636 = vmatpush.msra.mxu0 0.0
    %637 = vmatpush.msra.mxu0 %v552
    %638 = vmatpush.msra.mxu0 %v551
    %639 = vmatpush.msra.mxu0 %v550
    %640 = vmatpush.msra.mxu0 %v549
    %641 = vmatmul.f32.gmra.mxu0 %v623
    %v642 = vpop.f32.mrf.mxu0
    %v643 = vadd.f32 %v571, %v642
    %644 = vdwg.mxu0
    %v646 = vsel %vm49, %v537, 0
    %648 = vmatpush.msra.mxu0 0.0
    %649 = vmatpush.msra.mxu0 0.0
    %650 = vmatpush.msra.mxu0 0.0
    %651 = vmatpush.msra.mxu0 0.0
    %652 = vmatpush.msra.mxu0 0.0
    %653 = vmatpush.msra.mxu0 0.0
    %654 = vmatpush.msra.mxu0 0.0
    %655 = vmatpush.msra.mxu0 0.0
    %656 = vmatpush.msra.mxu0 0.0
    %657 = vmatpush.msra.mxu0 0.0
    %658 = vmatpush.msra.mxu0 0.0
    %659 = vmatpush.msra.mxu0 0.0
    %660 = vmatpush.msra.mxu0 %v556
    %661 = vmatpush.msra.mxu0 %v555
    %662 = vmatpush.msra.mxu0 %v554
    %663 = vmatpush.msra.mxu0 %v553
    %664 = vmatmul.f32.gmra.mxu0 %v646
    %v665 = vpop.f32.mrf.mxu0
    %v666 = vadd.f32 %v572, %v665
    %667 = vdwg.mxu0
    %v669 = vsel %vm49, %v538, 0
    %671 = vmatpush.msra.mxu0 0.0
    %672 = vmatpush.msra.mxu0 0.0
    %673 = vmatpush.msra.mxu0 0.0
    %674 = vmatpush.msra.mxu0 0.0
    %675 = vmatpush.msra.mxu0 0.0
    %676 = vmatpush.msra.mxu0 0.0
    %677 = vmatpush.msra.mxu0 0.0
    %678 = vmatpush.msra.mxu0 0.0
    %679 = vmatpush.msra.mxu0 0.0
    %680 = vmatpush.msra.mxu0 0.0
    %681 = vmatpush.msra.mxu0 0.0
    %682 = vmatpush.msra.mxu0 0.0
    %683 = vmatpush.msra.mxu0 %v560
    %684 = vmatpush.msra.mxu0 %v559
    %685 = vmatpush.msra.mxu0 %v558
    %686 = vmatpush.msra.mxu0 %v557
    %687 = vmatmul.f32.gmra.mxu0 %v669
    %v688 = vpop.f32.mrf.mxu0
    %v689 = vadd.f32 %v573, %v688
    %690 = vdwg.mxu0
    %v692 = vsel %vm49, %v539, 0
    %694 = vmatpush.msra.mxu0 0.0
    %695 = vmatpush.msra.mxu0 0.0
    %696 = vmatpush.msra.mxu0 0.0
    %697 = vmatpush.msra.mxu0 0.0
    %698 = vmatpush.msra.mxu0 0.0
    %699 = vmatpush.msra.mxu0 0.0
    %700 = vmatpush.msra.mxu0 0.0
    %701 = vmatpush.msra.mxu0 0.0
    %702 = vmatpush.msra.mxu0 0.0
    %703 = vmatpush.msra.mxu0 0.0
    %704 = vmatpush.msra.mxu0 0.0
    %705 = vmatpush.msra.mxu0 0.0
    %706 = vmatpush.msra.mxu0 %v564
    %707 = vmatpush.msra.mxu0 %v563
    %708 = vmatpush.msra.mxu0 %v562
    %709 = vmatpush.msra.mxu0 %v561
    %710 = vmatmul.f32.gmra.mxu0 %v692
    %v711 = vpop.f32.mrf.mxu0
    %v712 = vadd.f32 %v574, %v711
    %713 = vdwg.mxu0
    %v715 = vsel %vm49, %v540, 0
    %717 = vmatpush.msra.mxu0 0.0
    %718 = vmatpush.msra.mxu0 0.0
    %719 = vmatpush.msra.mxu0 0.0
    %720 = vmatpush.msra.mxu0 0.0
    %721 = vmatpush.msra.mxu0 0.0
    %722 = vmatpush.msra.mxu0 0.0
    %723 = vmatpush.msra.mxu0 0.0
    %724 = vmatpush.msra.mxu0 0.0
    %725 = vmatpush.msra.mxu0 0.0
    %726 = vmatpush.msra.mxu0 0.0
    %727 = vmatpush.msra.mxu0 0.0
    %728 = vmatpush.msra.mxu0 0.0
    %729 = vmatpush.msra.mxu0 %v568
    %730 = vmatpush.msra.mxu0 %v567
    %731 = vmatpush.msra.mxu0 %v566
    %732 = vmatpush.msra.mxu0 %v565
    %733 = vmatmul.f32.gmra.mxu0 %v715
    %v734 = vpop.f32.mrf.mxu0
    %v735 = vadd.f32 %v575, %v734
    %736 = vdwg.mxu0
    %v737 = vtanh.pop %v597
    %v738 = vtanh.pop %v620
    %v739 = vtanh.pop %v643
    %v740 = vtanh.pop %v666
    %v741 = vtanh.pop %v689
    %v742 = vtanh.pop %v712
    %v743 = vtanh.pop %v735
    %v744 = vmul.f32 %v737, 2.5
    %v745 = vmul.f32 %v738, 2.5
    %v746 = vmul.f32 %v739, 2.5
    %v747 = vmul.f32 %v740, 2.5
    %v748 = vmul.f32 %v741, 2.5
    %v749 = vmul.f32 %v742, 2.5
    %v750 = vmul.f32 %v743, 2.5
    %751 = vst [vmem:[%s6] sm:$0xff] %v744
    %752 = vst [vmem:[%s6 + $0x8] sm:$0xff] %v745
    %753 = vst [vmem:[%s6 + $0x10] sm:$0xff] %v746
    %754 = vst [vmem:[%s6 + $0x18] sm:$0xff] %v747
    %755 = vst [vmem:[%s6 + $0x20] sm:$0xff] %v748
    %756 = vst [vmem:[%s6 + $0x28] sm:$0xff] %v749
    %757 = vst [vmem:[%s6 + $0x30] sm:$0xff] %v750
    // Predicated region
    $region30: #{controller_fused.1} parent=1 // pred_check
      _
    $region31: #{controller_fused.1} parent=1 // pred_check_branch
      %759 = sbr.rel (0) target = $region33
    $region32: #{controller_fused.1} parent=1 // pred_region
      _
    $region33: #{controller_fused.1} parent=1 // pred_fallthru
      _
    // Predicated region
    $region34: #{controller_fused.1} parent=1 // pred_check
      _
    $region35: #{controller_fused.1} parent=1 // pred_check_branch
      %761 = sbr.rel (0) target = $region37
    $region36: #{controller_fused.1} parent=1 // pred_region
      _
    $region37: #{controller_fused.1} parent=1 // pred_fallthru
      _
    // Predicated region
    $region38: #{controller_fused.1} parent=1 // pred_check
      _
    $region39: #{controller_fused.1} parent=1 // pred_check_branch
      %763 = sbr.rel (0) target = $region41
    $region40: #{controller_fused.1} parent=1 // pred_region
      _
    $region41: #{controller_fused.1} parent=1 // pred_fallthru
      _
    // Predicated region
    $region42: #{controller_fused.1} parent=1 // pred_check
      _
    $region43: #{controller_fused.1} parent=1 // pred_check_branch
      %765 = sbr.rel (0) target = $region45
    $region44: #{controller_fused.1} parent=1 // pred_region
      _
    $region45: #{controller_fused.1} parent=1 // pred_fallthru
      _
    // Predicated region
    $region46: #{controller_fused.1} parent=1 // pred_check
      _
    $region47: #{controller_fused.1} parent=1 // pred_check_branch
      %767 = sbr.rel (0) target = $region49
    $region48: #{controller_fused.1} parent=1 // pred_region
      _
    $region49: #{controller_fused.1} parent=1 // pred_fallthru
      _
    // Predicated region
    $region50: #{controller_fused.1} parent=1 // pred_check
      _
    $region51: #{controller_fused.1} parent=1 // pred_check_branch
      %769 = sbr.rel (0) target = $region53
    $region52: #{controller_fused.1} parent=1 // pred_region
      _
    $region53: #{controller_fused.1} parent=1 // pred_fallthru
      _
    %770 = vsyncpa [#allocation4], 1

</llo_original>
